<compile_context>
chip_gen: v6e
topology: v6e:2x2x1
jax: 0.10.0
libtpu: 0.0.40
codegen_flags: <defaults>
</compile_context>

<pallas_src>
import functools

import jax
import jax.numpy as jnp
from jax.experimental import pallas as pl
from jax.experimental.pallas import tpu as pltpu


def _round_up(x, m):
    return ((x + m - 1) // m) * m


def _pick_block(total, align, target):
    """Largest divisor of `total` that is a multiple of `align` and <= target.

    Falls back to `total` (full-extent block, always legal) if `total` is not
    a multiple of `align`.  Guarantees no host-side padding is ever needed.
    """
    if total % align != 0:
        return total
    target = max(align, min(int(target), total))
    d = (target // align) * align
    while d >= align:
        if total % d == 0:
            return d
        d -= align
    return align  # unreachable: `align` always divides `total` here


def _probe_kernel(seed_ref, p_ref, wp_ref, o_ref, *, block_k, wp_resident):
    # seed_ref: (TB, NPAD)  f32   q @ Wq + bias, computed outside the kernel
    # p_ref:    (TB, TK)    cdt   flattened-passage activation tile
    # wp_ref:   (K, NPAD) or (TK, NPAD)  cdt  passage weights
    # o_ref:    (TB, NPAD)  f32   output tile == accumulator (resident over K)
    k = pl.program_id(1)

    # First K step of this B-tile: seed the (resident) output block.
    @pl.when(k == 0)
    def _seed():
        o_ref[...] = seed_ref[...]

    if wp_resident:
        # Whole Wp lives in VMEM (constant index_map): slice the K chunk here.
        start = pl.multiple_of(k * block_k, block_k)
        w = wp_ref[pl.ds(start, block_k), :]
    else:
        w = wp_ref[...]

    # Main HBM-bound reduction over the flattened passage features.
    o_ref[...] += jnp.dot(p_ref[...], w, preferred_element_type=jnp.float32)


def prepare_probe_params(weight, bias, hidden_dim, num_passages, *,
                         stream_dtype=jnp.float32):
    """One-time (model-load) prep of the Linear parameters.

    Splits / transposes / pads the nn.Linear weight so no per-call weight work
    remains on the hot path.
    """
    H, N = hidden_dim, num_passages
    D = (N + 1) * H
    assert weight.shape == (N, D), (weight.shape, (N, D))
    assert bias.shape == (N,)
    sdt = jnp.dtype(stream_dtype)
    NPAD = _round_up(N, 128)  # lane-dense stores; do NOT grow to 256 (HBM-bound)
    # Query slice stays f32: its matmul is tiny and done by XLA outside.
    wq = jnp.pad(weight[:, :H].T.astype(jnp.float32), ((0, 0), (0, NPAD - N)))
    # Passage slice is the streamed weight -> stream dtype.
    wp = jnp.pad(weight[:, H:].T.astype(sdt), ((0, 0), (0, NPAD - N)))
    b2 = jnp.pad(bias.astype(jnp.float32), (0, NPAD - N)).reshape(1, NPAD)
    return dict(wq=wq, wp=wp, bias=b2, hidden_dim=H, num_passages=N,
                npad=NPAD, stream_dtype=sdt)


def multi_concat_probe(query_emb, passage_embs, weight=None, bias=None, *,
                       params=None, block_b=None, block_k=None,
                       compute_dtype=None, use_pallas=None,
                       wp_max_resident_bytes=16 << 20):
    """
    query_emb:    (B, H)
    passage_embs: (B, N, H)
    weight:       (N, (N+1)*H)  nn.Linear weight layout  (or pass `params`)
    bias:         (N,)
    returns logits (B, N) float32
    """
    B, H = query_emb.shape
    B2, N, H2 = passage_embs.shape
    assert B == B2 and H == H2
    K = N * H

    if params is None:
        assert weight is not None and bias is not None
        cdt = jnp.dtype(compute_dtype) if compute_dtype is not None \
            else jnp.dtype(jnp.float32)
        # TODO(synk): in a serving path, call prepare_probe_params once at
        # model load instead of per call (the weights are constants).
        params = prepare_probe_params(weight, bias, H, N, stream_dtype=cdt)
    cdt = params["stream_dtype"]
    NPAD = params["npad"]
    wq, wp, b2 = params["wq"], params["wp"], params["bias"]
    assert params["hidden_dim"] == H and params["num_passages"] == N

    # Row-major (B, N, H) -> (B, N*H) is a pure bitcast (no relayout copy).
    p_flat = passage_embs.reshape(B, K)

    # Tiny query-side matmul + bias handled by XLA (f32): the (B, NPAD) seed.
    seed = jnp.dot(query_emb.astype(jnp.float32), wq,
                   preferred_element_type=jnp.float32) + b2

    if use_pallas is None:
        # Dispatch on streamed bytes, not just B: below ~4 MiB the launch /
        # per-step overhead dwarfs the work.
        use_pallas = B * K * cdt.itemsize >= (4 << 20)
    if not use_pallas:
        logits = seed + jnp.dot(p_flat.astype(cdt), wp,
                                preferred_element_type=jnp.float32)
        return logits[:, :N]

    # ---------------- tile sizes (divisors of B / K => zero host padding) ----
    if block_b is None:
        block_b = _pick_block(B, 8, 512)
        # v7x has 2 TensorCores: keep >= 2 tiles on the "parallel" B axis.
        if B // block_b == 1 and B >= 16:
            block_b = _pick_block(B, 8, B // 2)
    else:
        block_b = _pick_block(B, 8, block_b)
    if block_k is None:
        block_k = _pick_block(K, 128, 2048)   # >= ~4 MiB/step at block_b=512 f32
    else:
        block_k = _pick_block(K, 128, block_k)
    grid = (B // block_b, K // block_k)       # K (reduction) innermost

    # No-op when inputs already in the streaming dtype (default f32 path).
    p = p_flat.astype(cdt)

    # Wp residency: one DMA total instead of one re-stream per B-tile.
    itemsize = cdt.itemsize
    wp_bytes = K * NPAD * itemsize
    wp_resident = (2 * wp_bytes) <= wp_max_resident_bytes
    if wp_resident:
        wp_spec = pl.BlockSpec((K, NPAD), lambda bi, ki: (0, 0))
    else:
        wp_spec = pl.BlockSpec((block_k, NPAD), lambda bi, ki: (ki, 0))

    # VMEM budget: double-buffered p/seed tiles + weights + resident output.
    est = (2 * block_b * block_k * itemsize            # passage tiles
           + 2 * block_b * NPAD * 4                    # seed tiles
           + 2 * block_b * NPAD * 4                    # output (conservative)
           + (2 * wp_bytes if wp_resident else 2 * block_k * NPAD * itemsize))
    try:
        vmem_cap = int(pltpu.get_tpu_info().vmem_capacity_bytes)
    except Exception:
        vmem_cap = 64 << 20                            # v7x-safe fallback
    vmem_limit = int(min(vmem_cap * 3 // 4, max(32 << 20, 2 * est)))

    kernel = functools.partial(_probe_kernel, block_k=block_k,
                               wp_resident=wp_resident)

    out = pl.pallas_call(
        kernel,
        out_shape=jax.ShapeDtypeStruct((B, NPAD), jnp.float32),
        grid_spec=pltpu.PrefetchScalarGridSpec(
            num_scalar_prefetch=0,
            grid=grid,
            in_specs=[
                pl.BlockSpec((block_b, NPAD), lambda bi, ki: (bi, 0)),      # seed
                pl.BlockSpec((block_b, block_k), lambda bi, ki: (bi, ki)),  # p
                wp_spec,                                                    # Wp
            ],
            out_specs=pl.BlockSpec((block_b, NPAD), lambda bi, ki: (bi, 0)),
        ),
        compiler_params=pltpu.CompilerParams(
            dimension_semantics=("parallel", "arbitrary"),
            vmem_limit_bytes=vmem_limit,
        ),
    )(seed, p, wp)

    return out[:, :N]


# ------------------------------ test helpers ------------------------------

def _reference(query_emb, passage_embs, weight, bias):
    B, N, H = passage_embs.shape
    concat_vec = jnp.concatenate(
        [query_emb, passage_embs.reshape(B, N * H)], axis=1)
    return concat_vec @ weight.T + bias


def _make_inputs(key, B, H, N):
    D = (N + 1) * H
    k_q, k_p, k_w, k_b = jax.random.split(key, 4)
    query_emb = jax.random.normal(k_q, (B, H), dtype=jnp.float32)
    passage_embs = jax.random.normal(k_p, (B, N, H), dtype=jnp.float32)
    # nn.Linear default init: uniform +-1/sqrt(fan_in)
    bound = 1.0 / jnp.sqrt(jnp.float32(D))
    weight = jax.random.uniform(k_w, (N, D), jnp.float32, -bound, bound)
    bias = jax.random.uniform(k_b, (N,), jnp.float32, -bound, bound)
    return query_emb, passage_embs, weight, bias


if __name__ == "__main__":
    key = jax.random.PRNGKey(0)
    k1, k2 = jax.random.split(key)

    # --- test 1: module-scale shapes, forced through Pallas (1x1 grid, ------
    # ---           full-extent blocks, resident Wp) --------------------------
    B, H, N = 2, 32, 4
    q1, p1, w1, b1 = _make_inputs(k1, B, H, N)
    ref1 = _reference(q1, p1, w1, b1)
    out1 = multi_concat_probe(q1, p1, w1, b1, use_pallas=True)
    jax.block_until_ready(out1)
    assert out1.shape == (B, N)
    assert jnp.allclose(out1, ref1, atol=1e-4, rtol=1e-4)

    # --- test 2: multi-tile grid, hoisted params, resident Wp sliced with ---
    # ---           pl.ds across 4 K steps and 2 B tiles ----------------------
    B2, H2, N2 = 64, 128, 8
    q2, p2, w2, b2v = _make_inputs(k2, B2, H2, N2)
    ref2 = _reference(q2, p2, w2, b2v)
    params2 = prepare_probe_params(w2, b2v, H2, N2)
    out2 = multi_concat_probe(q2, p2, params=params2, use_pallas=True,
                              block_b=32, block_k=256)
    jax.block_until_ready(out2)
    assert out2.shape == (B2, N2)
    assert jnp.allclose(out2, ref2, atol=1e-3, rtol=1e-3)

    # --- test 3: streamed (K-tiled) Wp code path -----------------------------
    out3 = multi_concat_probe(q2, p2, w2, b2v, use_pallas=True,
                              block_b=32, block_k=256,
                              wp_max_resident_bytes=0)
    jax.block_until_ready(out3)
    assert jnp.allclose(out3, ref2, atol=1e-3, rtol=1e-3)

    # --- test 4: bf16 streaming of p / Wp with f32 accumulation --------------
    out4 = multi_concat_probe(q2, p2, w2, b2v, use_pallas=True,
                              compute_dtype=jnp.bfloat16)
    jax.block_until_ready(out4)
    assert jnp.allclose(out4, ref2, atol=5e-2, rtol=5e-2)

    # --- test 5: tiny-problem auto dispatch (plain XLA fallback) -------------
    out5 = multi_concat_probe(q1, p1, w1, b1)
    assert jnp.allclose(out5, ref1, atol=1e-4, rtol=1e-4)

    print("KERNEL_OK")
</pallas_src>

<mosaic_0001>
module attributes {stable_mosaic.version = 11 : i64} {
  func.func @_probe_kernel(%arg0: i32, %arg1: i32, %arg2: memref<2x128xf32, #tpu.memory_space<vmem>>, %arg3: memref<2x128xf32, #tpu.memory_space<vmem>>, %arg4: memref<128x128xf32, #tpu.memory_space<vmem>>, %arg5: memref<2x128xf32, #tpu.memory_space<vmem>>) attributes {dimension_semantics = [#tpu.dimension_semantics<parallel>, #tpu.dimension_semantics<arbitrary>], iteration_bounds = array<i64: 1, 1>, scalar_prefetch = 0 : i64, scratch_operands = 0 : i64, tpu.core_type = #tpu.core_type<tc>, window_params = [{transform_indices = @transform_0, window_bounds = array<i64: 2, 128>}, {transform_indices = @transform_1, window_bounds = array<i64: 2, 128>}, {pipeline_mode = #tpu.pipeline_mode<synchronous>, transform_indices = @transform_2, window_bounds = array<i64: 128, 128>}, {transform_indices = @transform_3, window_bounds = array<i64: 2, 128>}]} {
    %c0_i32 = arith.constant 0 : i32
    %0 = arith.cmpi eq, %arg1, %c0_i32 : i32
    %1 = arith.extui %0 : i1 to i32
    %c0_i32_0 = arith.constant 0 : i32
    %2 = arith.cmpi ne, %1, %c0_i32_0 : i32
    scf.if %2 {
      %c0_7 = arith.constant 0 : index
      %c0_8 = arith.constant 0 : index
      %12 = vector.load %arg2[%c0_7, %c0_8] : memref<2x128xf32, #tpu.memory_space<vmem>>, vector<2x128xf32>
      %c0_9 = arith.constant 0 : index
      %c0_10 = arith.constant 0 : index
      %13 = vector.load %arg5[%c0_9, %c0_10] : memref<2x128xf32, #tpu.memory_space<vmem>>, vector<2x128xf32>
      tpu.vector_store %arg5[%c0_9, %c0_10], %12 {strides = array<i32>} : memref<2x128xf32, #tpu.memory_space<vmem>>, vector<2x128xf32>,
    } else {
    }
    %c128_i32 = arith.constant 128 : i32
    %3 = arith.muli %arg1, %c128_i32 : i32
    %4 = tpu.assume_multiple %3, 128 : i32
    %5 = arith.index_cast %4 : i32 to index
    %c0 = arith.constant 0 : index
    %6 = vector.load %arg4[%5, %c0] : memref<128x128xf32, #tpu.memory_space<vmem>>, vector<128x128xf32>
    %c0_1 = arith.constant 0 : index
    %c0_2 = arith.constant 0 : index
    %7 = vector.load %arg5[%c0_1, %c0_2] : memref<2x128xf32, #tpu.memory_space<vmem>>, vector<2x128xf32>
    %c0_3 = arith.constant 0 : index
    %c0_4 = arith.constant 0 : index
    %8 = vector.load %arg3[%c0_3, %c0_4] : memref<2x128xf32, #tpu.memory_space<vmem>>, vector<2x128xf32>
    %cst = arith.constant dense<0.000000e+00> : vector<2x128xf32>
    %9 = tpu.matmul %8, %6, %cst {dimension_numbers = #tpu.dot_dimension_numbers<[1], [0], [0], [1], [0, 0, 1, 1], [], []>} : vector<2x128xf32>, vector<128x128xf32>, vector<2x128xf32> -> vector<2x128xf32>
    %10 = arith.addf %7, %9 : vector<2x128xf32>
    %c0_5 = arith.constant 0 : index
    %c0_6 = arith.constant 0 : index
    %11 = vector.load %arg5[%c0_5, %c0_6] : memref<2x128xf32, #tpu.memory_space<vmem>>, vector<2x128xf32>
    tpu.vector_store %arg5[%c0_5, %c0_6], %10 {strides = array<i32>} : memref<2x128xf32, #tpu.memory_space<vmem>>, vector<2x128xf32>,
    return
  }
  func.func @transform_0(%arg0: i32, %arg1: i32) -> (i32, i32) {
    %c0_i32 = arith.constant 0 : i32
    %c0_i32_0 = arith.constant 0 : i32
    return %arg0, %c0_i32 : i32, i32
  }
  func.func @transform_1(%arg0: i32, %arg1: i32) -> (i32, i32) {
    %c0_i32 = arith.constant 0 : i32
    return %arg0, %arg1 : i32, i32
  }
  func.func @transform_2(%arg0: i32, %arg1: i32) -> (i32, i32) {
    %c0_i32 = arith.constant 0 : i32
    %c0_i32_0 = arith.constant 0 : i32
    %c0_i32_1 = arith.constant 0 : i32
    return %c0_i32, %c0_i32_0 : i32, i32
  }
  func.func @transform_3(%arg0: i32, %arg1: i32) -> (i32, i32) {
    %c0_i32 = arith.constant 0 : i32
    %c0_i32_0 = arith.constant 0 : i32
    return %arg0, %c0_i32 : i32, i32
  }
}

</mosaic_0001>

<llo_original>
// kernel: tpu_custom_call.1
$region0: #{tpu_custom_call.1}
  #allocation0 [shape = 'u32[]', space=smem, size = 0x4, offset = 0x4, fixed_abs, tag = 'smem constant byte address 0x4 - core index']
  #allocation1 [shape = 'u32[144,128]{1,0:T(1,128)}', space=vmem, size = 0x12000, scoped, tag = 'internal scratch']
  %s0 = inlined_call_operand.hbm [shape: f32[2,128], index: 0, kind: input, shape index: {}]
  %s1 = inlined_call_operand.hbm [shape: f32[2,128], index: 1, kind: input, shape index: {}]
  %s2 = inlined_call_operand.hbm [shape: f32[128,128], index: 2, kind: input, shape index: {}]
  %s3 = inlined_call_operand.hbm [shape: f32[2,128], index: 3, kind: output, shape index: {}]
  %s4 = sld [smem:[#allocation0]]
  $region38: #{tpu_custom_call.1} parent=0
    _
  %s6 = ssub.s32 1, %s4
  %s7 = scalar_select 0, %s6, %s4
  $region1: #{tpu_custom_call.1} parent=0
    #allocation2 [shape = 'u8[1024]{0}', space=vmem, size = 0x400, scoped, tag = 'input window, operand 0, single buffered']
    #allocation3 [shape = 's32[1]{0}', space=sflag, size = 0x4, scoped, tag = 'scoped memory for tpu_custom_call.1']
    #allocation4 [shape = 's32[1]{0}', space=sflag, size = 0x4, scoped, tag = 'scoped memory for tpu_custom_call.1']
    #allocation5 [shape = 'u8[1024]{0}', space=vmem, size = 0x400, scoped, tag = 'input window, operand 1, single buffered']
    #allocation6 [shape = 's32[1]{0}', space=sflag, size = 0x4, scoped, tag = 'scoped memory for tpu_custom_call.1']
    #allocation7 [shape = 'u8[65536]{0}', space=vmem, size = 0x10000, scoped, tag = 'input window, operand 2, single buffered']
    #allocation8 [shape = 'u8[1024]{0}', space=vmem, size = 0x400, scoped, tag = 'output window, operand 0, single buffered']
    %8 = vsyncpa [#allocation3], 0
    %9 = vsyncpa [#allocation6], 0
    %10 = vsyncpa [#allocation4], 0
    // Predicated region
    $region2: #{tpu_custom_call.1} parent=1 // pred_check
      _
    $region3: #{tpu_custom_call.1} parent=1 // pred_check_branch
      %12 = sbr.rel (0) target = $region5
    $region4: #{tpu_custom_call.1} parent=1 // pred_region
      %s14 = ssub.s32 32, 32
      %15 = vsyncadd [#allocation3], %s14
      %s17 = sshll.u32 [#allocation2], 4
      %s18 = int_to_ptr.vmem [resolvable:$true] %s17
      %20 = dma.hbm_to_vmem [thread:$0]  %s0, 32, %s18, [#allocation3]
    $region5: #{tpu_custom_call.1} parent=1 // pred_fallthru
      _
    // Predicated region
    $region6: #{tpu_custom_call.1} parent=1 // pred_check
      _
    $region7: #{tpu_custom_call.1} parent=1 // pred_check_branch
      %22 = sbr.rel (0) target = $region9
    $region8: #{tpu_custom_call.1} parent=1 // pred_region
      %s24 = ssub.s32 32, 32
      %25 = vsyncadd [#allocation6], %s24
      %s27 = sshll.u32 [#allocation5], 4
      %s28 = int_to_ptr.vmem [resolvable:$true] %s27
      %30 = dma.hbm_to_vmem [thread:$0]  %s1, 32, %s28, [#allocation6]
    $region9: #{tpu_custom_call.1} parent=1 // pred_fallthru
      _
    // Predicated region
    $region10: #{tpu_custom_call.1} parent=1 // pred_check
      _
    $region11: #{tpu_custom_call.1} parent=1 // pred_check_branch
      %32 = sbr.rel (0) target = $region13
    $region12: #{tpu_custom_call.1} parent=1 // pred_region
      %s34 = ssub.s32 2048, 2048
      %35 = vsyncadd [#allocation6], %s34
      %s36 = sshll.u32 [#allocation7], 4
      %s37 = int_to_ptr.vmem [resolvable:$true] %s36
      %42 = dma.hbm_to_vmem [thread:$0]  %s2, 2048, %s37, [#allocation6], 128, 128, 8
    $region13: #{tpu_custom_call.1} parent=1 // pred_fallthru
      _
    // Predicated region
    $region14: #{tpu_custom_call.1} parent=1 // pred_check
      _
    $region15: #{tpu_custom_call.1} parent=1 // pred_check_branch
      %44 = sbr.rel (0) target = $region17
    $region16: #{tpu_custom_call.1} parent=1 // pred_region
      %45 = dma.done [#allocation3], 32
    $region17: #{tpu_custom_call.1} parent=1 // pred_fallthru
      _
    // Predicated region
    $region18: #{tpu_custom_call.1} parent=1 // pred_check
      _
    $region19: #{tpu_custom_call.1} parent=1 // pred_check_branch
      %47 = sbr.rel (0) target = $region21
    $region20: #{tpu_custom_call.1} parent=1 // pred_region
      %48 = dma.done [#allocation6], 32
    $region21: #{tpu_custom_call.1} parent=1 // pred_fallthru
      _
    // Predicated region
    $region22: #{tpu_custom_call.1} parent=1 // pred_check
      _
    $region23: #{tpu_custom_call.1} parent=1 // pred_check_branch
      %50 = sbr.rel (0) target = $region25
    $region24: #{tpu_custom_call.1} parent=1 // pred_region
      %51 = dma.done [#allocation6], 2048
    $region25: #{tpu_custom_call.1} parent=1 // pred_fallthru
      _
    %p52 = scmp.eq.s32.totalorder 0, 0
    // Predicated region
    $region26: #{tpu_custom_call.1} parent=1 // pred_check
      %p53 = pneg %p52
    $region27: #{tpu_custom_call.1} parent=1 // pred_check_branch
      %55 = sbr.rel (%p53) target = $region29
    $region28: #{tpu_custom_call.1} parent=1 // pred_region
      %v56 = vld [vmem:[#allocation2] sm:$0x3]
      %57 = vst [vmem:[#allocation8] sm:$0x3] %v56
    $region29: #{tpu_custom_call.1} parent=1 // pred_fallthru
      _
    %s58 = smul.u32 0, 128
    %s59 = scalar_lea.vmem [#allocation7], %s58
    %v60 = vld [vmem:[%s59] sm:$0xff]
    %v61 = vld [vmem:[%s59 + $0x8] sm:$0xff]
    %v62 = vld [vmem:[%s59 + $0x10] sm:$0xff]
    %v63 = vld [vmem:[%s59 + $0x18] sm:$0xff]
    %v64 = vld [vmem:[%s59 + $0x20] sm:$0xff]
    %v65 = vld [vmem:[%s59 + $0x28] sm:$0xff]
    %v66 = vld [vmem:[%s59 + $0x30] sm:$0xff]
    %v67 = vld [vmem:[%s59 + $0x38] sm:$0xff]
    %v68 = vld [vmem:[%s59 + $0x40] sm:$0xff]
    %v69 = vld [vmem:[%s59 + $0x48] sm:$0xff]
    %v70 = vld [vmem:[%s59 + $0x50] sm:$0xff]
    %v71 = vld [vmem:[%s59 + $0x58] sm:$0xff]
    %v72 = vld [vmem:[%s59 + $0x60] sm:$0xff]
    %v73 = vld [vmem:[%s59 + $0x68] sm:$0xff]
    %v74 = vld [vmem:[%s59 + $0x70] sm:$0xff]
    %v75 = vld [vmem:[%s59 + $0x78] sm:$0xff]
    %v76 = vld [vmem:[#allocation8] sm:$0x3]
    %v77 = vld [vmem:[#allocation5] sm:$0x3]
    %78 = vmatprep.subr.mxu0 0.0
    %79 = vmatpush1.msra.mxu0 %v75
    %80 = vmatprep.subr.mxu0 0.0
    %81 = vmatpush1.msra.mxu0 %v74
    %82 = vmatprep.subr.mxu0 0.0
    %83 = vmatpush1.msra.mxu0 %v73
    %84 = vmatprep.subr.mxu0 0.0
    %85 = vmatpush1.msra.mxu0 %v72
    %86 = vmatprep.subr.mxu0 0.0
    %87 = vmatpush1.msra.mxu0 %v71
    %88 = vmatprep.subr.mxu0 0.0
    %89 = vmatpush1.msra.mxu0 %v70
    %90 = vmatprep.subr.mxu0 0.0
    %91 = vmatpush1.msra.mxu0 %v69
    %92 = vmatprep.subr.mxu0 0.0
    %93 = vmatpush1.msra.mxu0 %v68
    %94 = vmatprep.subr.mxu0 0.0
    %95 = vmatpush1.msra.mxu0 %v67
    %96 = vmatprep.subr.mxu0 0.0
    %97 = vmatpush1.msra.mxu0 %v66
    %98 = vmatprep.subr.mxu0 0.0
    %99 = vmatpush1.msra.mxu0 %v65
    %100 = vmatprep.subr.mxu0 0.0
    %101 = vmatpush1.msra.mxu0 %v64
    %102 = vmatprep.subr.mxu0 0.0
    %103 = vmatpush1.msra.mxu0 %v63
    %104 = vmatprep.subr.mxu0 0.0
    %105 = vmatpush1.msra.mxu0 %v62
    %106 = vmatprep.subr.mxu0 0.0
    %107 = vmatpush1.msra.mxu0 %v61
    %108 = vmatprep.subr.mxu0 0.0
    %109 = vmatpush1.msra.mxu0 %v60
    %110 = vmatprep.subr.mxu0 0.0
    %111 = vmatpush2.msra.mxu0 0.0
    %112 = vmatprep.subr.mxu0 0.0
    %113 = vmatpush2.msra.mxu0 0.0
    %114 = vmatprep.subr.mxu0 0.0
    %115 = vmatpush2.msra.mxu0 0.0
    %116 = vmatprep.subr.mxu0 0.0
    %117 = vmatpush2.msra.mxu0 0.0
    %118 = vmatprep.subr.mxu0 0.0
    %119 = vmatpush2.msra.mxu0 0.0
    %120 = vmatprep.subr.mxu0 0.0
    %121 = vmatpush2.msra.mxu0 0.0
    %122 = vmatprep.subr.mxu0 0.0
    %123 = vmatpush2.msra.mxu0 0.0
    %124 = vmatprep.subr.mxu0 0.0
    %125 = vmatpush2.msra.mxu0 0.0
    %126 = vmatprep.subr.mxu0 0.0
    %127 = vmatpush2.msra.mxu0 0.0
    %128 = vmatprep.subr.mxu0 0.0
    %129 = vmatpush2.msra.mxu0 0.0
    %130 = vmatprep.subr.mxu0 0.0
    %131 = vmatpush2.msra.mxu0 0.0
    %132 = vmatprep.subr.mxu0 0.0
    %133 = vmatpush2.msra.mxu0 0.0
    %134 = vmatprep.subr.mxu0 0.0
    %135 = vmatpush2.msra.mxu0 0.0
    %136 = vmatprep.subr.mxu0 0.0
    %137 = vmatpush2.msra.mxu0 0.0
    %138 = vmatprep.subr.mxu0 0.0
    %139 = vmatpush2.msra.mxu0 0.0
    %140 = vmatprep.subr.mxu0 0.0
    %141 = vmatpush2.msra.mxu0 0.0
    %142 = vmatprep.mubr.f32.mxu0 0.0
    %143 = vmatmul.mubr.f32.gmra.mxu0 %v77
    %v144 = vpop.f32.mrf.mxu0
    %v145 = vadd.f32 0.0, %v144
    %v146 = vpop.f32.mrf.mxu0
    %147 = vdwg.mxu0
    %v148 = vadd.f32 %v76, %v145
    %149 = vst [vmem:[#allocation8] sm:$0x3] %v148
    // Predicated region
    $region30: #{tpu_custom_call.1} parent=1 // pred_check
      _
    $region31: #{tpu_custom_call.1} parent=1 // pred_check_branch
      %151 = sbr.rel (0) target = $region33
    $region32: #{tpu_custom_call.1} parent=1 // pred_region
      %s153 = ssub.s32 32, 32
      %154 = vsyncadd [#allocation4], %s153
      %s156 = sshll.u32 [#allocation8], 4
      %s157 = int_to_ptr.vmem [resolvable:$true] %s156
      %159 = dma.vmem_to_hbm [thread:$0]  %s157, 32, %s3, [#allocation4]
    $region33: #{tpu_custom_call.1} parent=1 // pred_fallthru
      _
    // Predicated region
    $region34: #{tpu_custom_call.1} parent=1 // pred_check
      _
    $region35: #{tpu_custom_call.1} parent=1 // pred_check_branch
      %161 = sbr.rel (0) target = $region37
    $region36: #{tpu_custom_call.1} parent=1 // pred_region
      %162 = dma.done [#allocation4], 32
    $region37: #{tpu_custom_call.1} parent=1 // pred_fallthru
      _
    %163 = vsyncpa [#allocation3], 1
    %164 = vsyncpa [#allocation6], 1
    %165 = vsyncpa [#allocation4], 1

</llo_original>
